<compile_context>
chip_gen: v7x
topology: tpu7x:2x2x1
jax: 0.10.0
libtpu: 0.0.40
codegen_flags: <defaults>
</compile_context>

<pallas_src>
import functools

import numpy as np
import jax
import jax.numpy as jnp
from jax.experimental import pallas as pl
from jax.experimental.pallas import tpu as pltpu


def gaussian_kernel_1d(kernel_size=5, sigma=1.0):
    """1-D gaussian factor, identical to create_gaussian_kernel's kernel_1d.

    Since sum(k1) == 1, outer(k1, k1) (re-normalised) equals the 2-D kernel used
    by the PyTorch module up to fp rounding, so k1 is the separable factor.
    """
    x = np.linspace(-(kernel_size - 1) / 2, (kernel_size - 1) / 2, kernel_size)
    k1 = np.exp(-0.5 * x ** 2 / sigma ** 2)
    k1 = k1 / k1.sum()
    return k1  # float64, baked into the kernel as python-float constants


def gaussian_kernel_2d(kernel_size=5, sigma=1.0):
    """2-D kernel exactly as the PyTorch reference builds it (for the ref impl)."""
    k1 = gaussian_kernel_1d(kernel_size, sigma)
    k2 = np.outer(k1, k1)
    k2 = k2 / k2.sum()
    return k2.astype(np.float32)


def make_hf_loss_kernel(H, W, K, k1_taps):
    """Kernel body with the separable gaussian taps baked in as constants."""
    pad = K // 2
    taps = [float(t) for t in k1_taps]

    def hf_loss_kernel(zp_ref, out_ref):
        zp = zp_ref[...]                               # (tile_p, H+2p, W+2p) f32

        # Row (lane-direction) pass of the separable gaussian. Computed over all
        # padded rows because the column pass below reads rows 0 .. H+2p-1.
        # (Accumulator initialized from the first tap — no zeros+add.)
        t = taps[0] * zp[:, :, 0:W]
        for j in range(1, K):
            t = t + taps[j] * zp[:, :, j:j + W]        # (tile_p, H+2p, W)

        # Column (sublane-direction) pass.
        blur = taps[0] * t[:, 0:H, :]
        for i in range(1, K):
            blur = blur + taps[i] * t[:, i:i + H, :]   # (tile_p, H, W)

        z = zp[:, pad:pad + H, pad:pad + W]            # interior of z = x - y
        d = jnp.abs(z - blur)

        # Per-block partial sum: one deferred cross-lane/sublane reduce per
        # block (not per plane), no shared serial accumulator.
        s = jnp.sum(d, axis=2, keepdims=True)
        s = jnp.sum(s, axis=1, keepdims=True)
        s = jnp.sum(s, axis=0, keepdims=True)          # (1, 1, 1)
        # Lane-dense, unmasked (8,128) store; the wrapper reads element [g,0,0].
        out_ref[...] = jnp.broadcast_to(s, (1, 8, 128))

    return hf_loss_kernel


def _choose_tile_p(P, Hp, Wp):
    """Planes per block, targeting ~4 MiB per input block in *VMEM layout*.

    The last two dims of each (tile_p, Hp, Wp) block are laid out in (8, 128)
    tiles, so the real VMEM footprint uses the rounded-up dims. 4 MiB blocks,
    double-buffered plus a few block-sized temporaries, stay far below the
    explicit 48 MiB vmem limit (and v7x's 64 MiB physical VMEM).
    """
    padded_h = -(-Hp // 8) * 8
    padded_w = -(-Wp // 128) * 128
    plane_vmem_bytes = padded_h * padded_w * 4
    cap = max(1, (4 * 1024 * 1024) // plane_vmem_bytes)
    cap = int(min(cap, 512))
    return max(1, min(P, cap))


@functools.partial(jax.jit, static_argnames=("kernel_size", "sigma", "tile_p"))
def hf_loss(x, y, kernel_size=5, sigma=1.0, tile_p=None):
    """x, y: (B, C, H, W). Returns scalar f32 loss (mean |HF(x) - HF(y)|)."""
    B, C, H, W = x.shape
    P = B * C
    pad = kernel_size // 2
    Hp, Wp = H + 2 * pad, W + 2 * pad
    k1 = gaussian_kernel_1d(kernel_size, sigma)

    # z = x - y; the blur is linear so only z needs the (single) padded copy.
    # Under jit the subtract + reshape + pad fuse into one HBM pass.
    z = (jnp.asarray(x, jnp.float32) - jnp.asarray(y, jnp.float32)).reshape(P, H, W)

    if tile_p is None:
        tile_p = _choose_tile_p(P, Hp, Wp)
    G = -(-P // tile_p)          # ceil(P / tile_p)
    P_pad = G * tile_p

    # Spatial zero-pad (== F.conv2d padding=2) and plane-pad to a multiple of
    # tile_p; zero planes contribute exactly 0 to the sum.
    zp = jnp.pad(z, ((0, P_pad - P), (pad, pad), (pad, pad)))

    kernel_fn = make_hf_loss_kernel(H, W, kernel_size, k1)

    partials = pl.pallas_call(
        kernel_fn,
        out_shape=jax.ShapeDtypeStruct((G, 8, 128), jnp.float32),
        grid_spec=pltpu.PrefetchScalarGridSpec(
            num_scalar_prefetch=0,
            grid=(G,),
            in_specs=[pl.BlockSpec((tile_p, Hp, Wp), lambda g: (g, 0, 0))],
            out_specs=pl.BlockSpec((1, 8, 128), lambda g: (g, 0, 0)),
        ),
        compiler_params=pltpu.CompilerParams(
            dimension_semantics=("parallel",),       # independent blocks: both TCs on v7x
            vmem_limit_bytes=48 * 1024 * 1024,
        ),
    )(zp)

    total = float(B * C * H * W)
    return jnp.sum(partials[:, 0, 0]) / total


def hf_loss_ref(x, y, kernel_size=5, sigma=1.0):
    """Pure-JAX reference, faithful to the PyTorch module (25-tap, two blurs)."""
    B, C, H, W = x.shape
    pad = kernel_size // 2
    k2d = gaussian_kernel_2d(kernel_size, sigma)
    xp = jnp.pad(x, ((0, 0), (0, 0), (pad, pad), (pad, pad)))
    yp = jnp.pad(y, ((0, 0), (0, 0), (pad, pad), (pad, pad)))
    xb = jnp.zeros_like(x)
    yb = jnp.zeros_like(y)
    for i in range(kernel_size):
        for j in range(kernel_size):
            xb = xb + k2d[i, j] * xp[:, :, i:i + H, j:j + W]
            yb = yb + k2d[i, j] * yp[:, :, i:i + H, j:j + W]
    return jnp.mean(jnp.abs((x - xb) - (y - yb)))


if __name__ == "__main__":
    B, C, H, W = 2, 4, 16, 16
    key = jax.random.PRNGKey(0)
    kx, ky = jax.random.split(key)
    x = jax.random.uniform(kx, (B, C, H, W), dtype=jnp.float32)
    y = jax.random.uniform(ky, (B, C, H, W), dtype=jnp.float32)

    loss = jax.block_until_ready(hf_loss(x, y))
    ref = jax.block_until_ready(hf_loss_ref(x, y))

    assert np.allclose(np.asarray(loss), np.asarray(ref), rtol=1e-5, atol=1e-5), (
        float(loss), float(ref))
    print("KERNEL_OK")
</pallas_src>

<mosaic_0001>
module attributes {stable_mosaic.version = 11 : i64} {
  func.func @hf_loss_kernel(%arg0: i32, %arg1: memref<8x20x20xf32, #tpu.memory_space<vmem>>, %arg2: memref<1x8x128xf32, #tpu.memory_space<vmem>>) attributes {dimension_semantics = [#tpu.dimension_semantics<parallel>], iteration_bounds = array<i64: 1>, scalar_prefetch = 0 : i64, scratch_operands = 0 : i64, tpu.core_type = #tpu.core_type<tc>, window_params = [{transform_indices = @transform_0, window_bounds = array<i64: 8, 20, 20>}, {transform_indices = @transform_1, window_bounds = array<i64: 1, 8, 128>}]} {
    %c0 = arith.constant 0 : index
    %c0_0 = arith.constant 0 : index
    %c0_1 = arith.constant 0 : index
    %0 = vector.load %arg1[%c0, %c0_0, %c0_1] : memref<8x20x20xf32, #tpu.memory_space<vmem>>, vector<8x20x20xf32>
    %1 = vector.extract_strided_slice %0 {offsets = [0, 0, 0], sizes = [8, 20, 16], strides = [1, 1, 1]} : vector<8x20x20xf32> to vector<8x20x16xf32>
    %cst = arith.constant 0.054488685 : f32
    %2 = vector.broadcast %cst : f32 to vector<8x20x16xf32>
    %3 = arith.mulf %2, %1 : vector<8x20x16xf32>
    %4 = vector.extract_strided_slice %0 {offsets = [0, 0, 1], sizes = [8, 20, 16], strides = [1, 1, 1]} : vector<8x20x20xf32> to vector<8x20x16xf32>
    %cst_2 = arith.constant 0.244201347 : f32
    %5 = vector.broadcast %cst_2 : f32 to vector<8x20x16xf32>
    %6 = arith.mulf %5, %4 : vector<8x20x16xf32>
    %7 = arith.addf %3, %6 : vector<8x20x16xf32>
    %8 = vector.extract_strided_slice %0 {offsets = [0, 0, 2], sizes = [8, 20, 16], strides = [1, 1, 1]} : vector<8x20x20xf32> to vector<8x20x16xf32>
    %cst_3 = arith.constant 0.402619958 : f32
    %9 = vector.broadcast %cst_3 : f32 to vector<8x20x16xf32>
    %10 = arith.mulf %9, %8 : vector<8x20x16xf32>
    %11 = arith.addf %7, %10 : vector<8x20x16xf32>
    %12 = vector.extract_strided_slice %0 {offsets = [0, 0, 3], sizes = [8, 20, 16], strides = [1, 1, 1]} : vector<8x20x20xf32> to vector<8x20x16xf32>
    %cst_4 = arith.constant 0.244201347 : f32
    %13 = vector.broadcast %cst_4 : f32 to vector<8x20x16xf32>
    %14 = arith.mulf %13, %12 : vector<8x20x16xf32>
    %15 = arith.addf %11, %14 : vector<8x20x16xf32>
    %16 = vector.extract_strided_slice %0 {offsets = [0, 0, 4], sizes = [8, 20, 16], strides = [1, 1, 1]} : vector<8x20x20xf32> to vector<8x20x16xf32>
    %cst_5 = arith.constant 0.054488685 : f32
    %17 = vector.broadcast %cst_5 : f32 to vector<8x20x16xf32>
    %18 = arith.mulf %17, %16 : vector<8x20x16xf32>
    %19 = arith.addf %15, %18 : vector<8x20x16xf32>
    %20 = vector.extract_strided_slice %19 {offsets = [0, 0, 0], sizes = [8, 16, 16], strides = [1, 1, 1]} : vector<8x20x16xf32> to vector<8x16x16xf32>
    %cst_6 = arith.constant 0.054488685 : f32
    %21 = vector.broadcast %cst_6 : f32 to vector<8x16x16xf32>
    %22 = arith.mulf %21, %20 : vector<8x16x16xf32>
    %23 = vector.extract_strided_slice %19 {offsets = [0, 1, 0], sizes = [8, 16, 16], strides = [1, 1, 1]} : vector<8x20x16xf32> to vector<8x16x16xf32>
    %cst_7 = arith.constant 0.244201347 : f32
    %24 = vector.broadcast %cst_7 : f32 to vector<8x16x16xf32>
    %25 = arith.mulf %24, %23 : vector<8x16x16xf32>
    %26 = arith.addf %22, %25 : vector<8x16x16xf32>
    %27 = vector.extract_strided_slice %19 {offsets = [0, 2, 0], sizes = [8, 16, 16], strides = [1, 1, 1]} : vector<8x20x16xf32> to vector<8x16x16xf32>
    %cst_8 = arith.constant 0.402619958 : f32
    %28 = vector.broadcast %cst_8 : f32 to vector<8x16x16xf32>
    %29 = arith.mulf %28, %27 : vector<8x16x16xf32>
    %30 = arith.addf %26, %29 : vector<8x16x16xf32>
    %31 = vector.extract_strided_slice %19 {offsets = [0, 3, 0], sizes = [8, 16, 16], strides = [1, 1, 1]} : vector<8x20x16xf32> to vector<8x16x16xf32>
    %cst_9 = arith.constant 0.244201347 : f32
    %32 = vector.broadcast %cst_9 : f32 to vector<8x16x16xf32>
    %33 = arith.mulf %32, %31 : vector<8x16x16xf32>
    %34 = arith.addf %30, %33 : vector<8x16x16xf32>
    %35 = vector.extract_strided_slice %19 {offsets = [0, 4, 0], sizes = [8, 16, 16], strides = [1, 1, 1]} : vector<8x20x16xf32> to vector<8x16x16xf32>
    %cst_10 = arith.constant 0.054488685 : f32
    %36 = vector.broadcast %cst_10 : f32 to vector<8x16x16xf32>
    %37 = arith.mulf %36, %35 : vector<8x16x16xf32>
    %38 = arith.addf %34, %37 : vector<8x16x16xf32>
    %39 = vector.extract_strided_slice %0 {offsets = [0, 2, 2], sizes = [8, 16, 16], strides = [1, 1, 1]} : vector<8x20x20xf32> to vector<8x16x16xf32>
    %40 = arith.subf %39, %38 : vector<8x16x16xf32>
    %41 = math.absf %40 : vector<8x16x16xf32>
    %cst_11 = arith.constant dense<0.000000e+00> : vector<8x16xf32>
    %42 = vector.multi_reduction <add>, %41, %cst_11 [2] : vector<8x16x16xf32> to vector<8x16xf32>
    %43 = vector.shape_cast %42 : vector<8x16xf32> to vector<8x16x1xf32>
    %cst_12 = arith.constant dense<0.000000e+00> : vector<8x1xf32>
    %44 = vector.multi_reduction <add>, %43, %cst_12 [1] : vector<8x16x1xf32> to vector<8x1xf32>
    %45 = vector.shape_cast %44 : vector<8x1xf32> to vector<8x1x1xf32>
    %cst_13 = arith.constant dense<0.000000e+00> : vector<1x1xf32>
    %46 = vector.multi_reduction <add>, %45, %cst_13 [0] : vector<8x1x1xf32> to vector<1x1xf32>
    %47 = vector.shape_cast %46 : vector<1x1xf32> to vector<1x1x1xf32>
    %48 = vector.shape_cast %47 : vector<1x1x1xf32> to vector<1x1x1xf32>
    %49 = vector.broadcast %48 : vector<1x1x1xf32> to vector<1x8x128xf32>
    %c0_14 = arith.constant 0 : index
    %c0_15 = arith.constant 0 : index
    %c0_16 = arith.constant 0 : index
    %50 = vector.load %arg2[%c0_14, %c0_15, %c0_16] : memref<1x8x128xf32, #tpu.memory_space<vmem>>, vector<1x8x128xf32>
    tpu.vector_store %arg2[%c0_14, %c0_15, %c0_16], %49 {strides = array<i32>} : memref<1x8x128xf32, #tpu.memory_space<vmem>>, vector<1x8x128xf32>,
    return
  }
  func.func @transform_0(%arg0: i32) -> (i32, i32, i32) {
    %c0_i32 = arith.constant 0 : i32
    %c0_i32_0 = arith.constant 0 : i32
    %c0_i32_1 = arith.constant 0 : i32
    return %arg0, %c0_i32, %c0_i32_0 : i32, i32, i32
  }
  func.func @transform_1(%arg0: i32) -> (i32, i32, i32) {
    %c0_i32 = arith.constant 0 : i32
    %c0_i32_0 = arith.constant 0 : i32
    %c0_i32_1 = arith.constant 0 : i32
    return %arg0, %c0_i32, %c0_i32_0 : i32, i32, i32
  }
}

</mosaic_0001>

<llo_original>
// kernel: sub.1
$region0: #{sub.1}
  #allocation4 [shape = 's32[1]{0}', space=sflag, size = 0x4, scoped, tag = 'scoped memory for sub.1']
  %s0 = inlined_call_operand.hbm [shape: f32[2,4,16,16], index: 0, kind: input, shape index: {}]
  %s1 = inlined_call_operand.hbm [shape: f32[2,4,16,16], index: 1, kind: input, shape index: {}]
  %s2 = inlined_call_operand.vmem [shape: f32[2,4,16,16], index: 2, kind: output, shape index: {}]
  $region1: #{sub.1} parent=0
    #allocation0 [shape = 'u8[65536]{0}', space=vmem, size = 0x10000, scoped, tag = 'operand span for operand 0']
    #allocation1 [shape = 's32[1]{0}', space=sflag, size = 0x4, scoped, tag = 'scoped memory for sub.1']
    #allocation2 [shape = 'u8[65536]{0}', space=vmem, size = 0x10000, scoped, tag = 'operand span for operand 1']
    #allocation3 [shape = 's32[1]{0}', space=sflag, size = 0x4, scoped, tag = 'scoped memory for sub.1']
    %3 = vsyncpa [#allocation1], 0
    %4 = vsyncpa [#allocation3], 0
    %s6 = ssub.s32 2048, 2048
    %7 = vsyncadd [#allocation1], %s6
    %s8 = sshll.u32 [#allocation0], 4
    %s9 = int_to_ptr.vmem [resolvable:$true] %s8
    %14 = dma.hbm_to_vmem [thread:$0]  %s0, 2048, %s9, [#allocation1], 128, 128, 8
    %s16 = ssub.s32 2048, 2048
    %17 = vsyncadd [#allocation3], %s16
    %s18 = sshll.u32 [#allocation2], 4
    %s19 = int_to_ptr.vmem [resolvable:$true] %s18
    %24 = dma.hbm_to_vmem [thread:$0]  %s1, 2048, %s19, [#allocation3], 128, 128, 8
    %25 = dma.done [#allocation1], 2048
    %26 = dma.done [#allocation3], 2048
    %v27 = vld [vmem:[#allocation0] sm:$0xff]
    %v28 = vld [vmem:[#allocation2] sm:$0xff]
    %29 = xla_tuple %v27, %v28
    %30 = xla_tuple %29
    %v31 = vsub.f32 %v27, %v28
    %32 = xla_tuple %v31
    %33 = vst [vmem:[%s2] sm:$0xff] %v31
    %s34 = scalar_lea.vmem [#allocation0], 64
    %v35 = vld [vmem:[%s34] sm:$0xff]
    %s36 = scalar_lea.vmem [#allocation2], 64
    %v37 = vld [vmem:[%s36] sm:$0xff]
    %38 = xla_tuple %v35, %v37
    %39 = xla_tuple %38
    %v40 = vsub.f32 %v35, %v37
    %41 = xla_tuple %v40
    %s42 = scalar_lea.vmem %s2, 64
    %43 = vst [vmem:[%s42] sm:$0xff] %v40
    %s44 = scalar_lea.vmem [#allocation0], 16
    %v45 = vld [vmem:[%s44] sm:$0xff]
    %s46 = scalar_lea.vmem [#allocation2], 16
    %v47 = vld [vmem:[%s46] sm:$0xff]
    %48 = xla_tuple %v45, %v47
    %49 = xla_tuple %48
    %v50 = vsub.f32 %v45, %v47
    %51 = xla_tuple %v50
    %s52 = scalar_lea.vmem %s2, 16
    %53 = vst [vmem:[%s52] sm:$0xff] %v50
    %s54 = scalar_lea.vmem [#allocation0], 80
    %v55 = vld [vmem:[%s54] sm:$0xff]
    %s56 = scalar_lea.vmem [#allocation2], 80
    %v57 = vld [vmem:[%s56] sm:$0xff]
    %58 = xla_tuple %v55, %v57
    %59 = xla_tuple %58
    %v60 = vsub.f32 %v55, %v57
    %61 = xla_tuple %v60
    %s62 = scalar_lea.vmem %s2, 80
    %63 = vst [vmem:[%s62] sm:$0xff] %v60
    %s64 = scalar_lea.vmem [#allocation0], 32
    %v65 = vld [vmem:[%s64] sm:$0xff]
    %s66 = scalar_lea.vmem [#allocation2], 32
    %v67 = vld [vmem:[%s66] sm:$0xff]
    %68 = xla_tuple %v65, %v67
    %69 = xla_tuple %68
    %v70 = vsub.f32 %v65, %v67
    %71 = xla_tuple %v70
    %s72 = scalar_lea.vmem %s2, 32
    %73 = vst [vmem:[%s72] sm:$0xff] %v70
    %s74 = scalar_lea.vmem [#allocation0], 96
    %v75 = vld [vmem:[%s74] sm:$0xff]
    %s76 = scalar_lea.vmem [#allocation2], 96
    %v77 = vld [vmem:[%s76] sm:$0xff]
    %78 = xla_tuple %v75, %v77
    %79 = xla_tuple %78
    %v80 = vsub.f32 %v75, %v77
    %81 = xla_tuple %v80
    %s82 = scalar_lea.vmem %s2, 96
    %83 = vst [vmem:[%s82] sm:$0xff] %v80
    %s84 = scalar_lea.vmem [#allocation0], 48
    %v85 = vld [vmem:[%s84] sm:$0xff]
    %s86 = scalar_lea.vmem [#allocation2], 48
    %v87 = vld [vmem:[%s86] sm:$0xff]
    %88 = xla_tuple %v85, %v87
    %89 = xla_tuple %88
    %v90 = vsub.f32 %v85, %v87
    %91 = xla_tuple %v90
    %s92 = scalar_lea.vmem %s2, 48
    %93 = vst [vmem:[%s92] sm:$0xff] %v90
    %s94 = scalar_lea.vmem [#allocation0], 112
    %v95 = vld [vmem:[%s94] sm:$0xff]
    %s96 = scalar_lea.vmem [#allocation2], 112
    %v97 = vld [vmem:[%s96] sm:$0xff]
    %98 = xla_tuple %v95, %v97
    %99 = xla_tuple %98
    %v100 = vsub.f32 %v95, %v97
    %101 = xla_tuple %v100
    %s102 = scalar_lea.vmem %s2, 112
    %103 = vst [vmem:[%s102] sm:$0xff] %v100
    %s104 = scalar_lea.vmem [#allocation0], 8
    %v105 = vld [vmem:[%s104] sm:$0xff]
    %s106 = scalar_lea.vmem [#allocation2], 8
    %v107 = vld [vmem:[%s106] sm:$0xff]
    %108 = xla_tuple %v105, %v107
    %109 = xla_tuple %108
    %v110 = vsub.f32 %v105, %v107
    %111 = xla_tuple %v110
    %s112 = scalar_lea.vmem %s2, 8
    %113 = vst [vmem:[%s112] sm:$0xff] %v110
    %s114 = scalar_lea.vmem [#allocation0], 72
    %v115 = vld [vmem:[%s114] sm:$0xff]
    %s116 = scalar_lea.vmem [#allocation2], 72
    %v117 = vld [vmem:[%s116] sm:$0xff]
    %118 = xla_tuple %v115, %v117
    %119 = xla_tuple %118
    %v120 = vsub.f32 %v115, %v117
    %121 = xla_tuple %v120
    %s122 = scalar_lea.vmem %s2, 72
    %123 = vst [vmem:[%s122] sm:$0xff] %v120
    %s124 = scalar_lea.vmem [#allocation0], 24
    %v125 = vld [vmem:[%s124] sm:$0xff]
    %s126 = scalar_lea.vmem [#allocation2], 24
    %v127 = vld [vmem:[%s126] sm:$0xff]
    %128 = xla_tuple %v125, %v127
    %129 = xla_tuple %128
    %v130 = vsub.f32 %v125, %v127
    %131 = xla_tuple %v130
    %s132 = scalar_lea.vmem %s2, 24
    %133 = vst [vmem:[%s132] sm:$0xff] %v130
    %s134 = scalar_lea.vmem [#allocation0], 88
    %v135 = vld [vmem:[%s134] sm:$0xff]
    %s136 = scalar_lea.vmem [#allocation2], 88
    %v137 = vld [vmem:[%s136] sm:$0xff]
    %138 = xla_tuple %v135, %v137
    %139 = xla_tuple %138
    %v140 = vsub.f32 %v135, %v137
    %141 = xla_tuple %v140
    %s142 = scalar_lea.vmem %s2, 88
    %143 = vst [vmem:[%s142] sm:$0xff] %v140
    %s144 = scalar_lea.vmem [#allocation0], 40
    %v145 = vld [vmem:[%s144] sm:$0xff]
    %s146 = scalar_lea.vmem [#allocation2], 40
    %v147 = vld [vmem:[%s146] sm:$0xff]
    %148 = xla_tuple %v145, %v147
    %149 = xla_tuple %148
    %v150 = vsub.f32 %v145, %v147
    %151 = xla_tuple %v150
    %s152 = scalar_lea.vmem %s2, 40
    %153 = vst [vmem:[%s152] sm:$0xff] %v150
    %s154 = scalar_lea.vmem [#allocation0], 104
    %v155 = vld [vmem:[%s154] sm:$0xff]
    %s156 = scalar_lea.vmem [#allocation2], 104
    %v157 = vld [vmem:[%s156] sm:$0xff]
    %158 = xla_tuple %v155, %v157
    %159 = xla_tuple %158
    %v160 = vsub.f32 %v155, %v157
    %161 = xla_tuple %v160
    %s162 = scalar_lea.vmem %s2, 104
    %163 = vst [vmem:[%s162] sm:$0xff] %v160
    %s164 = scalar_lea.vmem [#allocation0], 56
    %v165 = vld [vmem:[%s164] sm:$0xff]
    %s166 = scalar_lea.vmem [#allocation2], 56
    %v167 = vld [vmem:[%s166] sm:$0xff]
    %168 = xla_tuple %v165, %v167
    %169 = xla_tuple %168
    %v170 = vsub.f32 %v165, %v167
    %171 = xla_tuple %v170
    %s172 = scalar_lea.vmem %s2, 56
    %173 = vst [vmem:[%s172] sm:$0xff] %v170
    %s174 = scalar_lea.vmem [#allocation0], 120
    %v175 = vld [vmem:[%s174] sm:$0xff]
    %s176 = scalar_lea.vmem [#allocation2], 120
    %v177 = vld [vmem:[%s176] sm:$0xff]
    %178 = xla_tuple %v175, %v177
    %179 = xla_tuple %178
    %v180 = vsub.f32 %v175, %v177
    %181 = xla_tuple %v180
    %s182 = scalar_lea.vmem %s2, 120
    %183 = vst [vmem:[%s182] sm:$0xff] %v180
    %184 = vsyncpa [#allocation1], 1
    %185 = vsyncpa [#allocation3], 1

// kernel: hf_loss.1
$region0: #{hf_loss.1}
  #allocation0 [shape = 'u32[]', space=smem, size = 0x4, offset = 0x4, fixed_abs, tag = 'smem constant byte address 0x4 - core index']
  #allocation1 [shape = 'u32[144,128]{1,0:T(1,128)}', space=vmem, size = 0x12000, scoped, tag = 'internal scratch']
  %s0 = inlined_call_operand.vmem [shape: f32[8,20,20], index: 0, kind: input, shape index: {}]
  %s1 = inlined_call_operand.vmem [shape: f32[1,8,128], index: 1, kind: output, shape index: {}]
  %s2 = sld [smem:[#allocation0]]
  $region14: #{hf_loss.1} parent=0
    _
  %s4 = ssub.s32 1, %s2
  %s5 = scalar_select 0, %s4, %s2
  // Predicated region
  $region2: #{hf_loss.1} parent=0 // pred_check
    _
  $region3: #{hf_loss.1} parent=0 // pred_check_branch
    %7 = sbr.rel (0) target = $region5
  $region4: #{hf_loss.1} parent=0 // pred_region
    _
  $region5: #{hf_loss.1} parent=0 // pred_fallthru
    _
  %v8 = vld [vmem:[%s0] sm:$0xff]
  %v9 = vld [vmem:[%s0 + $0x8] sm:$0xff]
  %v10 = vld [vmem:[%s0 + $0x10] sm:$0xf]
  %v11 = vld [vmem:[%s0 + $0x18] sm:$0xff]
  %v12 = vld [vmem:[%s0 + $0x20] sm:$0xff]
  %v13 = vld [vmem:[%s0 + $0x28] sm:$0xf]
  %v14 = vld [vmem:[%s0 + $0x30] sm:$0xff]
  %v15 = vld [vmem:[%s0 + $0x38] sm:$0xff]
  %v16 = vld [vmem:[%s0 + $0x40] sm:$0xf]
  %v17 = vld [vmem:[%s0 + $0x48] sm:$0xff]
  %v18 = vld [vmem:[%s0 + $0x50] sm:$0xff]
  %v19 = vld [vmem:[%s0 + $0x58] sm:$0xf]
  %v20 = vld [vmem:[%s0 + $0x60] sm:$0xff]
  %v21 = vld [vmem:[%s0 + $0x68] sm:$0xff]
  %v22 = vld [vmem:[%s0 + $0x70] sm:$0xf]
  %v23 = vld [vmem:[%s0 + $0x78] sm:$0xff]
  %v24 = vld [vmem:[%s0 + $0x80] sm:$0xff]
  %v25 = vld [vmem:[%s0 + $0x88] sm:$0xf]
  %v26 = vld [vmem:[%s0 + $0x90] sm:$0xff]
  %v27 = vld [vmem:[%s0 + $0x98] sm:$0xff]
  %v28 = vld [vmem:[%s0 + $0xa0] sm:$0xf]
  %v29 = vld [vmem:[%s0 + $0xa8] sm:$0xff]
  %v30 = vld [vmem:[%s0 + $0xb0] sm:$0xff]
  %v31 = vld [vmem:[%s0 + $0xb8] sm:$0xf]
  %v32 = vmul.f32 %v8, 0.054488685
  %v33 = vmul.f32 %v9, 0.054488685
  %v34 = vmul.f32 %v10, 0.054488685
  %v35 = vmul.f32 %v11, 0.054488685
  %v36 = vmul.f32 %v12, 0.054488685
  %v37 = vmul.f32 %v13, 0.054488685
  %v38 = vmul.f32 %v14, 0.054488685
  %v39 = vmul.f32 %v15, 0.054488685
  %v40 = vmul.f32 %v16, 0.054488685
  %v41 = vmul.f32 %v17, 0.054488685
  %v42 = vmul.f32 %v18, 0.054488685
  %v43 = vmul.f32 %v19, 0.054488685
  %v44 = vmul.f32 %v20, 0.054488685
  %v45 = vmul.f32 %v21, 0.054488685
  %v46 = vmul.f32 %v22, 0.054488685
  %v47 = vmul.f32 %v23, 0.054488685
  %v48 = vmul.f32 %v24, 0.054488685
  %v49 = vmul.f32 %v25, 0.054488685
  %v50 = vmul.f32 %v26, 0.054488685
  %v51 = vmul.f32 %v27, 0.054488685
  %v52 = vmul.f32 %v28, 0.054488685
  %v53 = vmul.f32 %v29, 0.054488685
  %v54 = vmul.f32 %v30, 0.054488685
  %v55 = vmul.f32 %v31, 0.054488685
  %v56 = vmul.f32 %v8, 0.24420135
  %v57 = vmul.f32 %v9, 0.24420135
  %v58 = vmul.f32 %v10, 0.24420135
  %v59 = vmul.f32 %v11, 0.24420135
  %v60 = vmul.f32 %v12, 0.24420135
  %v61 = vmul.f32 %v13, 0.24420135
  %v62 = vmul.f32 %v14, 0.24420135
  %v63 = vmul.f32 %v15, 0.24420135
  %v64 = vmul.f32 %v16, 0.24420135
  %v65 = vmul.f32 %v17, 0.24420135
  %v66 = vmul.f32 %v18, 0.24420135
  %v67 = vmul.f32 %v19, 0.24420135
  %v68 = vmul.f32 %v20, 0.24420135
  %v69 = vmul.f32 %v21, 0.24420135
  %v70 = vmul.f32 %v22, 0.24420135
  %v71 = vmul.f32 %v23, 0.24420135
  %v72 = vmul.f32 %v24, 0.24420135
  %v73 = vmul.f32 %v25, 0.24420135
  %v74 = vmul.f32 %v26, 0.24420135
  %v75 = vmul.f32 %v27, 0.24420135
  %v76 = vmul.f32 %v28, 0.24420135
  %v77 = vmul.f32 %v29, 0.24420135
  %v78 = vmul.f32 %v30, 0.24420135
  %v79 = vmul.f32 %v31, 0.24420135
  %104 = vrot.lane.b32.xlu0 %v56, 127
  %v105 = vpop.permute.xlu0 %104
  %106 = vrot.lane.b32.xlu0 %v57, 127
  %v107 = vpop.permute.xlu0 %106
  %108 = vrot.lane.b32.xlu0 %v58, 127
  %v109 = vpop.permute.xlu0 %108
  %110 = vrot.lane.b32.xlu0 %v59, 127
  %v111 = vpop.permute.xlu0 %110
  %112 = vrot.lane.b32.xlu0 %v60, 127
  %v113 = vpop.permute.xlu0 %112
  %114 = vrot.lane.b32.xlu0 %v61, 127
  %v115 = vpop.permute.xlu0 %114
  %116 = vrot.lane.b32.xlu0 %v62, 127
  %v117 = vpop.permute.xlu0 %116
  %118 = vrot.lane.b32.xlu0 %v63, 127
  %v119 = vpop.permute.xlu0 %118
  %120 = vrot.lane.b32.xlu0 %v64, 127
  %v121 = vpop.permute.xlu0 %120
  %122 = vrot.lane.b32.xlu0 %v65, 127
  %v123 = vpop.permute.xlu0 %122
  %124 = vrot.lane.b32.xlu0 %v66, 127
  %v125 = vpop.permute.xlu0 %124
  %126 = vrot.lane.b32.xlu0 %v67, 127
  %v127 = vpop.permute.xlu0 %126
  %128 = vrot.lane.b32.xlu0 %v68, 127
  %v129 = vpop.permute.xlu0 %128
  %130 = vrot.lane.b32.xlu0 %v69, 127
  %v131 = vpop.permute.xlu0 %130
  %132 = vrot.lane.b32.xlu0 %v70, 127
  %v133 = vpop.permute.xlu0 %132
  %134 = vrot.lane.b32.xlu0 %v71, 127
  %v135 = vpop.permute.xlu0 %134
  %136 = vrot.lane.b32.xlu0 %v72, 127
  %v137 = vpop.permute.xlu0 %136
  %138 = vrot.lane.b32.xlu0 %v73, 127
  %v139 = vpop.permute.xlu0 %138
  %140 = vrot.lane.b32.xlu0 %v74, 127
  %v141 = vpop.permute.xlu0 %140
  %142 = vrot.lane.b32.xlu0 %v75, 127
  %v143 = vpop.permute.xlu0 %142
  %144 = vrot.lane.b32.xlu0 %v76, 127
  %v145 = vpop.permute.xlu0 %144
  %146 = vrot.lane.b32.xlu0 %v77, 127
  %v147 = vpop.permute.xlu0 %146
  %148 = vrot.lane.b32.xlu0 %v78, 127
  %v149 = vpop.permute.xlu0 %148
  %150 = vrot.lane.b32.xlu0 %v79, 127
  %v151 = vpop.permute.xlu0 %150
  %v176 = vadd.f32 %v32, %v105
  %v177 = vadd.f32 %v33, %v107
  %v178 = vadd.f32 %v34, %v109
  %v179 = vadd.f32 %v35, %v111
  %v180 = vadd.f32 %v36, %v113
  %v181 = vadd.f32 %v37, %v115
  %v182 = vadd.f32 %v38, %v117
  %v183 = vadd.f32 %v39, %v119
  %v184 = vadd.f32 %v40, %v121
  %v185 = vadd.f32 %v41, %v123
  %v186 = vadd.f32 %v42, %v125
  %v187 = vadd.f32 %v43, %v127
  %v188 = vadd.f32 %v44, %v129
  %v189 = vadd.f32 %v45, %v131
  %v190 = vadd.f32 %v46, %v133
  %v191 = vadd.f32 %v47, %v135
  %v192 = vadd.f32 %v48, %v137
  %v193 = vadd.f32 %v49, %v139
  %v194 = vadd.f32 %v50, %v141
  %v195 = vadd.f32 %v51, %v143
  %v196 = vadd.f32 %v52, %v145
  %v197 = vadd.f32 %v53, %v147
  %v198 = vadd.f32 %v54, %v149
  %v199 = vadd.f32 %v55, %v151
  %v200 = vmul.f32 %v8, 0.40261996
  %v201 = vmul.f32 %v9, 0.40261996
  %v202 = vmul.f32 %v10, 0.40261996
  %v203 = vmul.f32 %v11, 0.40261996
  %v204 = vmul.f32 %v12, 0.40261996
  %v205 = vmul.f32 %v13, 0.40261996
  %v206 = vmul.f32 %v14, 0.40261996
  %v207 = vmul.f32 %v15, 0.40261996
  %v208 = vmul.f32 %v16, 0.40261996
  %v209 = vmul.f32 %v17, 0.40261996
  %v210 = vmul.f32 %v18, 0.40261996
  %v211 = vmul.f32 %v19, 0.40261996
  %v212 = vmul.f32 %v20, 0.40261996
  %v213 = vmul.f32 %v21, 0.40261996
  %v214 = vmul.f32 %v22, 0.40261996
  %v215 = vmul.f32 %v23, 0.40261996
  %v216 = vmul.f32 %v24, 0.40261996
  %v217 = vmul.f32 %v25, 0.40261996
  %v218 = vmul.f32 %v26, 0.40261996
  %v219 = vmul.f32 %v27, 0.40261996
  %v220 = vmul.f32 %v28, 0.40261996
  %v221 = vmul.f32 %v29, 0.40261996
  %v222 = vmul.f32 %v30, 0.40261996
  %v223 = vmul.f32 %v31, 0.40261996
  %248 = vrot.lane.b32.xlu0 %v200, 126
  %v249 = vpop.permute.xlu0 %248
  %250 = vrot.lane.b32.xlu0 %v201, 126
  %v251 = vpop.permute.xlu0 %250
  %252 = vrot.lane.b32.xlu0 %v202, 126
  %v253 = vpop.permute.xlu0 %252
  %254 = vrot.lane.b32.xlu0 %v203, 126
  %v255 = vpop.permute.xlu0 %254
  %256 = vrot.lane.b32.xlu0 %v204, 126
  %v257 = vpop.permute.xlu0 %256
  %258 = vrot.lane.b32.xlu0 %v205, 126
  %v259 = vpop.permute.xlu0 %258
  %260 = vrot.lane.b32.xlu0 %v206, 126
  %v261 = vpop.permute.xlu0 %260
  %262 = vrot.lane.b32.xlu0 %v207, 126
  %v263 = vpop.permute.xlu0 %262
  %264 = vrot.lane.b32.xlu0 %v208, 126
  %v265 = vpop.permute.xlu0 %264
  %266 = vrot.lane.b32.xlu0 %v209, 126
  %v267 = vpop.permute.xlu0 %266
  %268 = vrot.lane.b32.xlu0 %v210, 126
  %v269 = vpop.permute.xlu0 %268
  %270 = vrot.lane.b32.xlu0 %v211, 126
  %v271 = vpop.permute.xlu0 %270
  %272 = vrot.lane.b32.xlu0 %v212, 126
  %v273 = vpop.permute.xlu0 %272
  %274 = vrot.lane.b32.xlu0 %v213, 126
  %v275 = vpop.permute.xlu0 %274
  %276 = vrot.lane.b32.xlu0 %v214, 126
  %v277 = vpop.permute.xlu0 %276
  %278 = vrot.lane.b32.xlu0 %v215, 126
  %v279 = vpop.permute.xlu0 %278
  %280 = vrot.lane.b32.xlu0 %v216, 126
  %v281 = vpop.permute.xlu0 %280
  %282 = vrot.lane.b32.xlu0 %v217, 126
  %v283 = vpop.permute.xlu0 %282
  %284 = vrot.lane.b32.xlu0 %v218, 126
  %v285 = vpop.permute.xlu0 %284
  %286 = vrot.lane.b32.xlu0 %v219, 126
  %v287 = vpop.permute.xlu0 %286
  %288 = vrot.lane.b32.xlu0 %v220, 126
  %v289 = vpop.permute.xlu0 %288
  %290 = vrot.lane.b32.xlu0 %v221, 126
  %v291 = vpop.permute.xlu0 %290
  %292 = vrot.lane.b32.xlu0 %v222, 126
  %v293 = vpop.permute.xlu0 %292
  %294 = vrot.lane.b32.xlu0 %v223, 126
  %v295 = vpop.permute.xlu0 %294
  %v320 = vadd.f32 %v176, %v249
  %v321 = vadd.f32 %v177, %v251
  %v322 = vadd.f32 %v178, %v253
  %v323 = vadd.f32 %v179, %v255
  %v324 = vadd.f32 %v180, %v257
  %v325 = vadd.f32 %v181, %v259
  %v326 = vadd.f32 %v182, %v261
  %v327 = vadd.f32 %v183, %v263
  %v328 = vadd.f32 %v184, %v265
  %v329 = vadd.f32 %v185, %v267
  %v330 = vadd.f32 %v186, %v269
  %v331 = vadd.f32 %v187, %v271
  %v332 = vadd.f32 %v188, %v273
  %v333 = vadd.f32 %v189, %v275
  %v334 = vadd.f32 %v190, %v277
  %v335 = vadd.f32 %v191, %v279
  %v336 = vadd.f32 %v192, %v281
  %v337 = vadd.f32 %v193, %v283
  %v338 = vadd.f32 %v194, %v285
  %v339 = vadd.f32 %v195, %v287
  %v340 = vadd.f32 %v196, %v289
  %v341 = vadd.f32 %v197, %v291
  %v342 = vadd.f32 %v198, %v293
  %v343 = vadd.f32 %v199, %v295
  %344 = vrot.lane.b32.xlu0 %v56, 125
  %v345 = vpop.permute.xlu0 %344
  %346 = vrot.lane.b32.xlu0 %v57, 125
  %v347 = vpop.permute.xlu0 %346
  %348 = vrot.lane.b32.xlu0 %v58, 125
  %v349 = vpop.permute.xlu0 %348
  %350 = vrot.lane.b32.xlu0 %v59, 125
  %v351 = vpop.permute.xlu0 %350
  %352 = vrot.lane.b32.xlu0 %v60, 125
  %v353 = vpop.permute.xlu0 %352
  %354 = vrot.lane.b32.xlu0 %v61, 125
  %v355 = vpop.permute.xlu0 %354
  %356 = vrot.lane.b32.xlu0 %v62, 125
  %v357 = vpop.permute.xlu0 %356
  %358 = vrot.lane.b32.xlu0 %v63, 125
  %v359 = vpop.permute.xlu0 %358
  %360 = vrot.lane.b32.xlu0 %v64, 125
  %v361 = vpop.permute.xlu0 %360
  %362 = vrot.lane.b32.xlu0 %v65, 125
  %v363 = vpop.permute.xlu0 %362
  %364 = vrot.lane.b32.xlu0 %v66, 125
  %v365 = vpop.permute.xlu0 %364
  %366 = vrot.lane.b32.xlu0 %v67, 125
  %v367 = vpop.permute.xlu0 %366
  %368 = vrot.lane.b32.xlu0 %v68, 125
  %v369 = vpop.permute.xlu0 %368
  %370 = vrot.lane.b32.xlu0 %v69, 125
  %v371 = vpop.permute.xlu0 %370
  %372 = vrot.lane.b32.xlu0 %v70, 125
  %v373 = vpop.permute.xlu0 %372
  %374 = vrot.lane.b32.xlu0 %v71, 125
  %v375 = vpop.permute.xlu0 %374
  %376 = vrot.lane.b32.xlu0 %v72, 125
  %v377 = vpop.permute.xlu0 %376
  %378 = vrot.lane.b32.xlu0 %v73, 125
  %v379 = vpop.permute.xlu0 %378
  %380 = vrot.lane.b32.xlu0 %v74, 125
  %v381 = vpop.permute.xlu0 %380
  %382 = vrot.lane.b32.xlu0 %v75, 125
  %v383 = vpop.permute.xlu0 %382
  %384 = vrot.lane.b32.xlu0 %v76, 125
  %v385 = vpop.permute.xlu0 %384
  %386 = vrot.lane.b32.xlu0 %v77, 125
  %v387 = vpop.permute.xlu0 %386
  %388 = vrot.lane.b32.xlu0 %v78, 125
  %v389 = vpop.permute.xlu0 %388
  %390 = vrot.lane.b32.xlu0 %v79, 125
  %v391 = vpop.permute.xlu0 %390
  %v416 = vadd.f32 %v320, %v345
  %v417 = vadd.f32 %v321, %v347
  %v418 = vadd.f32 %v322, %v349
  %v419 = vadd.f32 %v323, %v351
  %v420 = vadd.f32 %v324, %v353
  %v421 = vadd.f32 %v325, %v355
  %v422 = vadd.f32 %v326, %v357
  %v423 = vadd.f32 %v327, %v359
  %v424 = vadd.f32 %v328, %v361
  %v425 = vadd.f32 %v329, %v363
  %v426 = vadd.f32 %v330, %v365
  %v427 = vadd.f32 %v331, %v367
  %v428 = vadd.f32 %v332, %v369
  %v429 = vadd.f32 %v333, %v371
  %v430 = vadd.f32 %v334, %v373
  %v431 = vadd.f32 %v335, %v375
  %v432 = vadd.f32 %v336, %v377
  %v433 = vadd.f32 %v337, %v379
  %v434 = vadd.f32 %v338, %v381
  %v435 = vadd.f32 %v339, %v383
  %v436 = vadd.f32 %v340, %v385
  %v437 = vadd.f32 %v341, %v387
  %v438 = vadd.f32 %v342, %v389
  %v439 = vadd.f32 %v343, %v391
  %464 = vrot.lane.b32.xlu0 %v32, 124
  %v465 = vpop.permute.xlu0 %464
  %466 = vrot.lane.b32.xlu0 %v33, 124
  %v467 = vpop.permute.xlu0 %466
  %468 = vrot.lane.b32.xlu0 %v34, 124
  %v469 = vpop.permute.xlu0 %468
  %470 = vrot.lane.b32.xlu0 %v35, 124
  %v471 = vpop.permute.xlu0 %470
  %472 = vrot.lane.b32.xlu0 %v36, 124
  %v473 = vpop.permute.xlu0 %472
  %474 = vrot.lane.b32.xlu0 %v37, 124
  %v475 = vpop.permute.xlu0 %474
  %476 = vrot.lane.b32.xlu0 %v38, 124
  %v477 = vpop.permute.xlu0 %476
  %478 = vrot.lane.b32.xlu0 %v39, 124
  %v479 = vpop.permute.xlu0 %478
  %480 = vrot.lane.b32.xlu0 %v40, 124
  %v481 = vpop.permute.xlu0 %480
  %482 = vrot.lane.b32.xlu0 %v41, 124
  %v483 = vpop.permute.xlu0 %482
  %484 = vrot.lane.b32.xlu0 %v42, 124
  %v485 = vpop.permute.xlu0 %484
  %486 = vrot.lane.b32.xlu0 %v43, 124
  %v487 = vpop.permute.xlu0 %486
  %488 = vrot.lane.b32.xlu0 %v44, 124
  %v489 = vpop.permute.xlu0 %488
  %490 = vrot.lane.b32.xlu0 %v45, 124
  %v491 = vpop.permute.xlu0 %490
  %492 = vrot.lane.b32.xlu0 %v46, 124
  %v493 = vpop.permute.xlu0 %492
  %494 = vrot.lane.b32.xlu0 %v47, 124
  %v495 = vpop.permute.xlu0 %494
  %496 = vrot.lane.b32.xlu0 %v48, 124
  %v497 = vpop.permute.xlu0 %496
  %498 = vrot.lane.b32.xlu0 %v49, 124
  %v499 = vpop.permute.xlu0 %498
  %500 = vrot.lane.b32.xlu0 %v50, 124
  %v501 = vpop.permute.xlu0 %500
  %502 = vrot.lane.b32.xlu0 %v51, 124
  %v503 = vpop.permute.xlu0 %502
  %504 = vrot.lane.b32.xlu0 %v52, 124
  %v505 = vpop.permute.xlu0 %504
  %506 = vrot.lane.b32.xlu0 %v53, 124
  %v507 = vpop.permute.xlu0 %506
  %508 = vrot.lane.b32.xlu0 %v54, 124
  %v509 = vpop.permute.xlu0 %508
  %510 = vrot.lane.b32.xlu0 %v55, 124
  %v511 = vpop.permute.xlu0 %510
  %v536 = vadd.f32 %v416, %v465
  %v537 = vadd.f32 %v417, %v467
  %v538 = vadd.f32 %v418, %v469
  %v539 = vadd.f32 %v419, %v471
  %v540 = vadd.f32 %v420, %v473
  %v541 = vadd.f32 %v421, %v475
  %v542 = vadd.f32 %v422, %v477
  %v543 = vadd.f32 %v423, %v479
  %v544 = vadd.f32 %v424, %v481
  %v545 = vadd.f32 %v425, %v483
  %v546 = vadd.f32 %v426, %v485
  %v547 = vadd.f32 %v427, %v487
  %v548 = vadd.f32 %v428, %v489
  %v549 = vadd.f32 %v429, %v491
  %v550 = vadd.f32 %v430, %v493
  %v551 = vadd.f32 %v431, %v495
  %v552 = vadd.f32 %v432, %v497
  %v553 = vadd.f32 %v433, %v499
  %v554 = vadd.f32 %v434, %v501
  %v555 = vadd.f32 %v435, %v503
  %v556 = vadd.f32 %v436, %v505
  %v557 = vadd.f32 %v437, %v507
  %v558 = vadd.f32 %v438, %v509
  %v559 = vadd.f32 %v439, %v511
  %v560 = vmul.f32 %v536, 0.054488685
  %v561 = vmul.f32 %v537, 0.054488685
  %v562 = vmul.f32 %v539, 0.054488685
  %v563 = vmul.f32 %v540, 0.054488685
  %v564 = vmul.f32 %v542, 0.054488685
  %v565 = vmul.f32 %v543, 0.054488685
  %v566 = vmul.f32 %v545, 0.054488685
  %v567 = vmul.f32 %v546, 0.054488685
  %v568 = vmul.f32 %v548, 0.054488685
  %v569 = vmul.f32 %v549, 0.054488685
  %v570 = vmul.f32 %v551, 0.054488685
  %v571 = vmul.f32 %v552, 0.054488685
  %v572 = vmul.f32 %v554, 0.054488685
  %v573 = vmul.f32 %v555, 0.054488685
  %v574 = vmul.f32 %v557, 0.054488685
  %v575 = vmul.f32 %v558, 0.054488685
  %v576 = vmul.f32 %v536, 0.24420135
  %v577 = vmul.f32 %v537, 0.24420135
  %v578 = vmul.f32 %v538, 0.24420135
  %v579 = vmul.f32 %v539, 0.24420135
  %v580 = vmul.f32 %v540, 0.24420135
  %v581 = vmul.f32 %v541, 0.24420135
  %v582 = vmul.f32 %v542, 0.24420135
  %v583 = vmul.f32 %v543, 0.24420135
  %v584 = vmul.f32 %v544, 0.24420135
  %v585 = vmul.f32 %v545, 0.24420135
  %v586 = vmul.f32 %v546, 0.24420135
  %v587 = vmul.f32 %v547, 0.24420135
  %v588 = vmul.f32 %v548, 0.24420135
  %v589 = vmul.f32 %v549, 0.24420135
  %v590 = vmul.f32 %v550, 0.24420135
  %v591 = vmul.f32 %v551, 0.24420135
  %v592 = vmul.f32 %v552, 0.24420135
  %v593 = vmul.f32 %v553, 0.24420135
  %v594 = vmul.f32 %v554, 0.24420135
  %v595 = vmul.f32 %v555, 0.24420135
  %v596 = vmul.f32 %v556, 0.24420135
  %v597 = vmul.f32 %v557, 0.24420135
  %v598 = vmul.f32 %v558, 0.24420135
  %v599 = vmul.f32 %v559, 0.24420135
  %vm624 = vcmask 1046528
  %v625 = vrot.slane %v576, 1
  %v626 = vrot.slane %v577, 1
  %v627 = vsel %vm624, %v625, %v626
  %v628 = vrot.slane %v578, 1
  %v629 = vsel %vm624, %v626, %v628
  %v630 = vrot.slane %v579, 1
  %v631 = vrot.slane %v580, 1
  %v632 = vsel %vm624, %v630, %v631
  %v633 = vrot.slane %v581, 1
  %v634 = vsel %vm624, %v631, %v633
  %v635 = vrot.slane %v582, 1
  %v636 = vrot.slane %v583, 1
  %v637 = vsel %vm624, %v635, %v636
  %v638 = vrot.slane %v584, 1
  %v639 = vsel %vm624, %v636, %v638
  %v640 = vrot.slane %v585, 1
  %v641 = vrot.slane %v586, 1
  %v642 = vsel %vm624, %v640, %v641
  %v643 = vrot.slane %v587, 1
  %v644 = vsel %vm624, %v641, %v643
  %v645 = vrot.slane %v588, 1
  %v646 = vrot.slane %v589, 1
  %v647 = vsel %vm624, %v645, %v646
  %v648 = vrot.slane %v590, 1
  %v649 = vsel %vm624, %v646, %v648
  %v650 = vrot.slane %v591, 1
  %v651 = vrot.slane %v592, 1
  %v652 = vsel %vm624, %v650, %v651
  %v653 = vrot.slane %v593, 1
  %v654 = vsel %vm624, %v651, %v653
  %v655 = vrot.slane %v594, 1
  %v656 = vrot.slane %v595, 1
  %v657 = vsel %vm624, %v655, %v656
  %v658 = vrot.slane %v596, 1
  %v659 = vsel %vm624, %v656, %v658
  %v660 = vrot.slane %v597, 1
  %v661 = vrot.slane %v598, 1
  %v662 = vsel %vm624, %v660, %v661
  %v663 = vrot.slane %v599, 1
  %v664 = vsel %vm624, %v661, %v663
  %v681 = vadd.f32 %v560, %v627
  %v682 = vadd.f32 %v561, %v629
  %v683 = vadd.f32 %v562, %v632
  %v684 = vadd.f32 %v563, %v634
  %v685 = vadd.f32 %v564, %v637
  %v686 = vadd.f32 %v565, %v639
  %v687 = vadd.f32 %v566, %v642
  %v688 = vadd.f32 %v567, %v644
  %v689 = vadd.f32 %v568, %v647
  %v690 = vadd.f32 %v569, %v649
  %v691 = vadd.f32 %v570, %v652
  %v692 = vadd.f32 %v571, %v654
  %v693 = vadd.f32 %v572, %v657
  %v694 = vadd.f32 %v573, %v659
  %v695 = vadd.f32 %v574, %v662
  %v696 = vadd.f32 %v575, %v664
  %v697 = vmul.f32 %v536, 0.40261996
  %v698 = vmul.f32 %v537, 0.40261996
  %v699 = vmul.f32 %v538, 0.40261996
  %v700 = vmul.f32 %v539, 0.40261996
  %v701 = vmul.f32 %v540, 0.40261996
  %v702 = vmul.f32 %v541, 0.40261996
  %v703 = vmul.f32 %v542, 0.40261996
  %v704 = vmul.f32 %v543, 0.40261996
  %v705 = vmul.f32 %v544, 0.40261996
  %v706 = vmul.f32 %v545, 0.40261996
  %v707 = vmul.f32 %v546, 0.40261996
  %v708 = vmul.f32 %v547, 0.40261996
  %v709 = vmul.f32 %v548, 0.40261996
  %v710 = vmul.f32 %v549, 0.40261996
  %v711 = vmul.f32 %v550, 0.40261996
  %v712 = vmul.f32 %v551, 0.40261996
  %v713 = vmul.f32 %v552, 0.40261996
  %v714 = vmul.f32 %v553, 0.40261996
  %v715 = vmul.f32 %v554, 0.40261996
  %v716 = vmul.f32 %v555, 0.40261996
  %v717 = vmul.f32 %v556, 0.40261996
  %v718 = vmul.f32 %v557, 0.40261996
  %v719 = vmul.f32 %v558, 0.40261996
  %v720 = vmul.f32 %v559, 0.40261996
  %vm745 = vcmask 1045504
  %v746 = vrot.slane %v697, 2
  %v747 = vrot.slane %v698, 2
  %v748 = vsel %vm745, %v746, %v747
  %v749 = vrot.slane %v699, 2
  %v750 = vsel %vm745, %v747, %v749
  %v751 = vrot.slane %v700, 2
  %v752 = vrot.slane %v701, 2
  %v753 = vsel %vm745, %v751, %v752
  %v754 = vrot.slane %v702, 2
  %v755 = vsel %vm745, %v752, %v754
  %v756 = vrot.slane %v703, 2
  %v757 = vrot.slane %v704, 2
  %v758 = vsel %vm745, %v756, %v757
  %v759 = vrot.slane %v705, 2
  %v760 = vsel %vm745, %v757, %v759
  %v761 = vrot.slane %v706, 2
  %v762 = vrot.slane %v707, 2
  %v763 = vsel %vm745, %v761, %v762
  %v764 = vrot.slane %v708, 2
  %v765 = vsel %vm745, %v762, %v764
  %v766 = vrot.slane %v709, 2
  %v767 = vrot.slane %v710, 2
  %v768 = vsel %vm745, %v766, %v767
  %v769 = vrot.slane %v711, 2
  %v770 = vsel %vm745, %v767, %v769
  %v771 = vrot.slane %v712, 2
  %v772 = vrot.slane %v713, 2
  %v773 = vsel %vm745, %v771, %v772
  %v774 = vrot.slane %v714, 2
  %v775 = vsel %vm745, %v772, %v774
  %v776 = vrot.slane %v715, 2
  %v777 = vrot.slane %v716, 2
  %v778 = vsel %vm745, %v776, %v777
  %v779 = vrot.slane %v717, 2
  %v780 = vsel %vm745, %v777, %v779
  %v781 = vrot.slane %v718, 2
  %v782 = vrot.slane %v719, 2
  %v783 = vsel %vm745, %v781, %v782
  %v784 = vrot.slane %v720, 2
  %v785 = vsel %vm745, %v782, %v784
  %v802 = vadd.f32 %v681, %v748
  %v803 = vadd.f32 %v682, %v750
  %v804 = vadd.f32 %v683, %v753
  %v805 = vadd.f32 %v684, %v755
  %v806 = vadd.f32 %v685, %v758
  %v807 = vadd.f32 %v686, %v760
  %v808 = vadd.f32 %v687, %v763
  %v809 = vadd.f32 %v688, %v765
  %v810 = vadd.f32 %v689, %v768
  %v811 = vadd.f32 %v690, %v770
  %v812 = vadd.f32 %v691, %v773
  %v813 = vadd.f32 %v692, %v775
  %v814 = vadd.f32 %v693, %v778
  %v815 = vadd.f32 %v694, %v780
  %v816 = vadd.f32 %v695, %v783
  %v817 = vadd.f32 %v696, %v785
  %vm818 = vcmask 1044480
  %v819 = vrot.slane %v576, 3
  %v820 = vrot.slane %v577, 3
  %v821 = vsel %vm818, %v819, %v820
  %v822 = vrot.slane %v578, 3
  %v823 = vsel %vm818, %v820, %v822
  %v824 = vrot.slane %v579, 3
  %v825 = vrot.slane %v580, 3
  %v826 = vsel %vm818, %v824, %v825
  %v827 = vrot.slane %v581, 3
  %v828 = vsel %vm818, %v825, %v827
  %v829 = vrot.slane %v582, 3
  %v830 = vrot.slane %v583, 3
  %v831 = vsel %vm818, %v829, %v830
  %v832 = vrot.slane %v584, 3
  %v833 = vsel %vm818, %v830, %v832
  %v834 = vrot.slane %v585, 3
  %v835 = vrot.slane %v586, 3
  %v836 = vsel %vm818, %v834, %v835
  %v837 = vrot.slane %v587, 3
  %v838 = vsel %vm818, %v835, %v837
  %v839 = vrot.slane %v588, 3
  %v840 = vrot.slane %v589, 3
  %v841 = vsel %vm818, %v839, %v840
  %v842 = vrot.slane %v590, 3
  %v843 = vsel %vm818, %v840, %v842
  %v844 = vrot.slane %v591, 3
  %v845 = vrot.slane %v592, 3
  %v846 = vsel %vm818, %v844, %v845
  %v847 = vrot.slane %v593, 3
  %v848 = vsel %vm818, %v845, %v847
  %v849 = vrot.slane %v594, 3
  %v850 = vrot.slane %v595, 3
  %v851 = vsel %vm818, %v849, %v850
  %v852 = vrot.slane %v596, 3
  %v853 = vsel %vm818, %v850, %v852
  %v854 = vrot.slane %v597, 3
  %v855 = vrot.slane %v598, 3
  %v856 = vsel %vm818, %v854, %v855
  %v857 = vrot.slane %v599, 3
  %v858 = vsel %vm818, %v855, %v857
  %v875 = vadd.f32 %v802, %v821
  %v876 = vadd.f32 %v803, %v823
  %v877 = vadd.f32 %v804, %v826
  %v878 = vadd.f32 %v805, %v828
  %v879 = vadd.f32 %v806, %v831
  %v880 = vadd.f32 %v807, %v833
  %v881 = vadd.f32 %v808, %v836
  %v882 = vadd.f32 %v809, %v838
  %v883 = vadd.f32 %v810, %v841
  %v884 = vadd.f32 %v811, %v843
  %v885 = vadd.f32 %v812, %v846
  %v886 = vadd.f32 %v813, %v848
  %v887 = vadd.f32 %v814, %v851
  %v888 = vadd.f32 %v815, %v853
  %v889 = vadd.f32 %v816, %v856
  %v890 = vadd.f32 %v817, %v858
  %v891 = vmul.f32 %v538, 0.054488685
  %v892 = vmul.f32 %v541, 0.054488685
  %v893 = vmul.f32 %v544, 0.054488685
  %v894 = vmul.f32 %v547, 0.054488685
  %v895 = vmul.f32 %v550, 0.054488685
  %v896 = vmul.f32 %v553, 0.054488685
  %v897 = vmul.f32 %v556, 0.054488685
  %v898 = vmul.f32 %v559, 0.054488685
  %vm923 = vcmask 1043456
  %v924 = vrot.slane %v560, 4
  %v925 = vrot.slane %v561, 4
  %v926 = vsel %vm923, %v924, %v925
  %v927 = vrot.slane %v891, 4
  %v928 = vsel %vm923, %v925, %v927
  %v929 = vrot.slane %v562, 4
  %v930 = vrot.slane %v563, 4
  %v931 = vsel %vm923, %v929, %v930
  %v932 = vrot.slane %v892, 4
  %v933 = vsel %vm923, %v930, %v932
  %v934 = vrot.slane %v564, 4
  %v935 = vrot.slane %v565, 4
  %v936 = vsel %vm923, %v934, %v935
  %v937 = vrot.slane %v893, 4
  %v938 = vsel %vm923, %v935, %v937
  %v939 = vrot.slane %v566, 4
  %v940 = vrot.slane %v567, 4
  %v941 = vsel %vm923, %v939, %v940
  %v942 = vrot.slane %v894, 4
  %v943 = vsel %vm923, %v940, %v942
  %v944 = vrot.slane %v568, 4
  %v945 = vrot.slane %v569, 4
  %v946 = vsel %vm923, %v944, %v945
  %v947 = vrot.slane %v895, 4
  %v948 = vsel %vm923, %v945, %v947
  %v949 = vrot.slane %v570, 4
  %v950 = vrot.slane %v571, 4
  %v951 = vsel %vm923, %v949, %v950
  %v952 = vrot.slane %v896, 4
  %v953 = vsel %vm923, %v950, %v952
  %v954 = vrot.slane %v572, 4
  %v955 = vrot.slane %v573, 4
  %v956 = vsel %vm923, %v954, %v955
  %v957 = vrot.slane %v897, 4
  %v958 = vsel %vm923, %v955, %v957
  %v959 = vrot.slane %v574, 4
  %v960 = vrot.slane %v575, 4
  %v961 = vsel %vm923, %v959, %v960
  %v962 = vrot.slane %v898, 4
  %v963 = vsel %vm923, %v960, %v962
  %v980 = vadd.f32 %v875, %v926
  %v981 = vadd.f32 %v876, %v928
  %v982 = vadd.f32 %v877, %v931
  %v983 = vadd.f32 %v878, %v933
  %v984 = vadd.f32 %v879, %v936
  %v985 = vadd.f32 %v880, %v938
  %v986 = vadd.f32 %v881, %v941
  %v987 = vadd.f32 %v882, %v943
  %v988 = vadd.f32 %v883, %v946
  %v989 = vadd.f32 %v884, %v948
  %v990 = vadd.f32 %v885, %v951
  %v991 = vadd.f32 %v886, %v953
  %v992 = vadd.f32 %v887, %v956
  %v993 = vadd.f32 %v888, %v958
  %v994 = vadd.f32 %v889, %v961
  %v995 = vadd.f32 %v890, %v963
  %vm1012 = vcmask 1041408
  %v1013 = vrot.slane %v980, 6
  %v1014 = vrot.slane %v981, 6
  %v1015 = vsel %vm1012, %v1013, %v1014
  %v1016 = vrot.slane %v982, 6
  %v1017 = vrot.slane %v983, 6
  %v1018 = vsel %vm1012, %v1016, %v1017
  %v1019 = vrot.slane %v984, 6
  %v1020 = vrot.slane %v985, 6
  %v1021 = vsel %vm1012, %v1019, %v1020
  %v1022 = vrot.slane %v986, 6
  %v1023 = vrot.slane %v987, 6
  %v1024 = vsel %vm1012, %v1022, %v1023
  %v1025 = vrot.slane %v988, 6
  %v1026 = vrot.slane %v989, 6
  %v1027 = vsel %vm1012, %v1025, %v1026
  %v1028 = vrot.slane %v990, 6
  %v1029 = vrot.slane %v991, 6
  %v1030 = vsel %vm1012, %v1028, %v1029
  %v1031 = vrot.slane %v992, 6
  %v1032 = vrot.slane %v993, 6
  %v1033 = vsel %vm1012, %v1031, %v1032
  %v1034 = vrot.slane %v994, 6
  %v1035 = vrot.slane %v995, 6
  %v1036 = vsel %vm1012, %v1034, %v1035
  %1037 = vrot.lane.b32.xlu0 %v1013, 2
  %v1038 = vpop.permute.xlu0 %1037
  %1039 = vrot.lane.b32.xlu0 %v1015, 2
  %v1040 = vpop.permute.xlu0 %1039
  %1041 = vrot.lane.b32.xlu0 %v1014, 2
  %v1042 = vpop.permute.xlu0 %1041
  %1043 = vrot.lane.b32.xlu0 %v1016, 2
  %v1044 = vpop.permute.xlu0 %1043
  %1045 = vrot.lane.b32.xlu0 %v1018, 2
  %v1046 = vpop.permute.xlu0 %1045
  %1047 = vrot.lane.b32.xlu0 %v1017, 2
  %v1048 = vpop.permute.xlu0 %1047
  %1049 = vrot.lane.b32.xlu0 %v1019, 2
  %v1050 = vpop.permute.xlu0 %1049
  %1051 = vrot.lane.b32.xlu0 %v1021, 2
  %v1052 = vpop.permute.xlu0 %1051
  %1053 = vrot.lane.b32.xlu0 %v1020, 2
  %v1054 = vpop.permute.xlu0 %1053
  %1055 = vrot.lane.b32.xlu0 %v1022, 2
  %v1056 = vpop.permute.xlu0 %1055
  %1057 = vrot.lane.b32.xlu0 %v1024, 2
  %v1058 = vpop.permute.xlu0 %1057
  %1059 = vrot.lane.b32.xlu0 %v1023, 2
  %v1060 = vpop.permute.xlu0 %1059
  %1061 = vrot.lane.b32.xlu0 %v1025, 2
  %v1062 = vpop.permute.xlu0 %1061
  %1063 = vrot.lane.b32.xlu0 %v1027, 2
  %v1064 = vpop.permute.xlu0 %1063
  %1065 = vrot.lane.b32.xlu0 %v1026, 2
  %v1066 = vpop.permute.xlu0 %1065
  %1067 = vrot.lane.b32.xlu0 %v1028, 2
  %v1068 = vpop.permute.xlu0 %1067
  %1069 = vrot.lane.b32.xlu0 %v1030, 2
  %v1070 = vpop.permute.xlu0 %1069
  %1071 = vrot.lane.b32.xlu0 %v1029, 2
  %v1072 = vpop.permute.xlu0 %1071
  %1073 = vrot.lane.b32.xlu0 %v1031, 2
  %v1074 = vpop.permute.xlu0 %1073
  %1075 = vrot.lane.b32.xlu0 %v1033, 2
  %v1076 = vpop.permute.xlu0 %1075
  %1077 = vrot.lane.b32.xlu0 %v1032, 2
  %v1078 = vpop.permute.xlu0 %1077
  %1079 = vrot.lane.b32.xlu0 %v1034, 2
  %v1080 = vpop.permute.xlu0 %1079
  %1081 = vrot.lane.b32.xlu0 %v1036, 2
  %v1082 = vpop.permute.xlu0 %1081
  %1083 = vrot.lane.b32.xlu0 %v1035, 2
  %v1084 = vpop.permute.xlu0 %1083
  %v1109 = vsub.f32 %v8, %v1038
  %v1110 = vsub.f32 %v9, %v1040
  %v1111 = vsub.f32 %v10, %v1042
  %v1112 = vsub.f32 %v11, %v1044
  %v1113 = vsub.f32 %v12, %v1046
  %v1114 = vsub.f32 %v13, %v1048
  %v1115 = vsub.f32 %v14, %v1050
  %v1116 = vsub.f32 %v15, %v1052
  %v1117 = vsub.f32 %v16, %v1054
  %v1118 = vsub.f32 %v17, %v1056
  %v1119 = vsub.f32 %v18, %v1058
  %v1120 = vsub.f32 %v19, %v1060
  %v1121 = vsub.f32 %v20, %v1062
  %v1122 = vsub.f32 %v21, %v1064
  %v1123 = vsub.f32 %v22, %v1066
  %v1124 = vsub.f32 %v23, %v1068
  %v1125 = vsub.f32 %v24, %v1070
  %v1126 = vsub.f32 %v25, %v1072
  %v1127 = vsub.f32 %v26, %v1074
  %v1128 = vsub.f32 %v27, %v1076
  %v1129 = vsub.f32 %v28, %v1078
  %v1130 = vsub.f32 %v29, %v1080
  %v1131 = vsub.f32 %v30, %v1082
  %v1132 = vsub.f32 %v31, %v1084
  %v1133 = vand.u32 2147483647, %v1109
  %v1134 = vand.u32 2147483647, %v1110
  %v1135 = vand.u32 2147483647, %v1111
  %v1136 = vand.u32 2147483647, %v1112
  %v1137 = vand.u32 2147483647, %v1113
  %v1138 = vand.u32 2147483647, %v1114
  %v1139 = vand.u32 2147483647, %v1115
  %v1140 = vand.u32 2147483647, %v1116
  %v1141 = vand.u32 2147483647, %v1117
  %v1142 = vand.u32 2147483647, %v1118
  %v1143 = vand.u32 2147483647, %v1119
  %v1144 = vand.u32 2147483647, %v1120
  %v1145 = vand.u32 2147483647, %v1121
  %v1146 = vand.u32 2147483647, %v1122
  %v1147 = vand.u32 2147483647, %v1123
  %v1148 = vand.u32 2147483647, %v1124
  %v1149 = vand.u32 2147483647, %v1125
  %v1150 = vand.u32 2147483647, %v1126
  %v1151 = vand.u32 2147483647, %v1127
  %v1152 = vand.u32 2147483647, %v1128
  %v1153 = vand.u32 2147483647, %v1129
  %v1154 = vand.u32 2147483647, %v1130
  %v1155 = vand.u32 2147483647, %v1131
  %v1156 = vand.u32 2147483647, %v1132
  %1181 = vrot.lane.b32.xlu0 %v1133, 126
  %v1182 = vpop.permute.xlu0 %1181
  %1183 = vrot.lane.b32.xlu0 %v1134, 126
  %v1184 = vpop.permute.xlu0 %1183
  %1185 = vrot.lane.b32.xlu0 %v1135, 126
  %v1186 = vpop.permute.xlu0 %1185
  %1187 = vrot.lane.b32.xlu0 %v1136, 126
  %v1188 = vpop.permute.xlu0 %1187
  %1189 = vrot.lane.b32.xlu0 %v1137, 126
  %v1190 = vpop.permute.xlu0 %1189
  %1191 = vrot.lane.b32.xlu0 %v1138, 126
  %v1192 = vpop.permute.xlu0 %1191
  %1193 = vrot.lane.b32.xlu0 %v1139, 126
  %v1194 = vpop.permute.xlu0 %1193
  %1195 = vrot.lane.b32.xlu0 %v1140, 126
  %v1196 = vpop.permute.xlu0 %1195
  %1197 = vrot.lane.b32.xlu0 %v1141, 126
  %v1198 = vpop.permute.xlu0 %1197
  %1199 = vrot.lane.b32.xlu0 %v1142, 126
  %v1200 = vpop.permute.xlu0 %1199
  %1201 = vrot.lane.b32.xlu0 %v1143, 126
  %v1202 = vpop.permute.xlu0 %1201
  %1203 = vrot.lane.b32.xlu0 %v1144, 126
  %v1204 = vpop.permute.xlu0 %1203
  %1205 = vrot.lane.b32.xlu0 %v1145, 126
  %v1206 = vpop.permute.xlu0 %1205
  %1207 = vrot.lane.b32.xlu0 %v1146, 126
  %v1208 = vpop.permute.xlu0 %1207
  %1209 = vrot.lane.b32.xlu0 %v1147, 126
  %v1210 = vpop.permute.xlu0 %1209
  %1211 = vrot.lane.b32.xlu0 %v1148, 126
  %v1212 = vpop.permute.xlu0 %1211
  %1213 = vrot.lane.b32.xlu0 %v1149, 126
  %v1214 = vpop.permute.xlu0 %1213
  %1215 = vrot.lane.b32.xlu0 %v1150, 126
  %v1216 = vpop.permute.xlu0 %1215
  %1217 = vrot.lane.b32.xlu0 %v1151, 126
  %v1218 = vpop.permute.xlu0 %1217
  %1219 = vrot.lane.b32.xlu0 %v1152, 126
  %v1220 = vpop.permute.xlu0 %1219
  %1221 = vrot.lane.b32.xlu0 %v1153, 126
  %v1222 = vpop.permute.xlu0 %1221
  %1223 = vrot.lane.b32.xlu0 %v1154, 126
  %v1224 = vpop.permute.xlu0 %1223
  %1225 = vrot.lane.b32.xlu0 %v1155, 126
  %v1226 = vpop.permute.xlu0 %1225
  %1227 = vrot.lane.b32.xlu0 %v1156, 126
  %v1228 = vpop.permute.xlu0 %1227
  %vm1253 = vcmask 130050
  %v1254 = vsel %vm1253, %v1182, 0.0
  %1255 = vadd.xlane.f32.xlu0 %v1254
  %v1256 = vpop.xlane.xlu0 %1255
  %vm1257 = vcmask 130048
  %v1258 = vsel %vm1257, %v1184, 0.0
  %1259 = vadd.xlane.f32.xlu0 %v1258
  %v1260 = vpop.xlane.xlu0 %1259
  %vm1261 = vcmask 123904
  %v1262 = vsel %vm1261, %v1186, 0.0
  %1263 = vadd.xlane.f32.xlu0 %v1262
  %v1264 = vpop.xlane.xlu0 %1263
  %v1265 = vsel %vm1253, %v1188, 0.0
  %1266 = vadd.xlane.f32.xlu0 %v1265
  %v1267 = vpop.xlane.xlu0 %1266
  %v1268 = vsel %vm1257, %v1190, 0.0
  %1269 = vadd.xlane.f32.xlu0 %v1268
  %v1270 = vpop.xlane.xlu0 %1269
  %v1271 = vsel %vm1261, %v1192, 0.0
  %1272 = vadd.xlane.f32.xlu0 %v1271
  %v1273 = vpop.xlane.xlu0 %1272
  %v1274 = vsel %vm1253, %v1194, 0.0
  %1275 = vadd.xlane.f32.xlu0 %v1274
  %v1276 = vpop.xlane.xlu0 %1275
  %v1277 = vsel %vm1257, %v1196, 0.0
  %1278 = vadd.xlane.f32.xlu0 %v1277
  %v1279 = vpop.xlane.xlu0 %1278
  %v1280 = vsel %vm1261, %v1198, 0.0
  %1281 = vadd.xlane.f32.xlu0 %v1280
  %v1282 = vpop.xlane.xlu0 %1281
  %v1283 = vsel %vm1253, %v1200, 0.0
  %1284 = vadd.xlane.f32.xlu0 %v1283
  %v1285 = vpop.xlane.xlu0 %1284
  %v1286 = vsel %vm1257, %v1202, 0.0
  %1287 = vadd.xlane.f32.xlu0 %v1286
  %v1288 = vpop.xlane.xlu0 %1287
  %v1289 = vsel %vm1261, %v1204, 0.0
  %1290 = vadd.xlane.f32.xlu0 %v1289
  %v1291 = vpop.xlane.xlu0 %1290
  %v1292 = vsel %vm1253, %v1206, 0.0
  %1293 = vadd.xlane.f32.xlu0 %v1292
  %v1294 = vpop.xlane.xlu0 %1293
  %v1295 = vsel %vm1257, %v1208, 0.0
  %1296 = vadd.xlane.f32.xlu0 %v1295
  %v1297 = vpop.xlane.xlu0 %1296
  %v1298 = vsel %vm1261, %v1210, 0.0
  %1299 = vadd.xlane.f32.xlu0 %v1298
  %v1300 = vpop.xlane.xlu0 %1299
  %v1301 = vsel %vm1253, %v1212, 0.0
  %1302 = vadd.xlane.f32.xlu0 %v1301
  %v1303 = vpop.xlane.xlu0 %1302
  %v1304 = vsel %vm1257, %v1214, 0.0
  %1305 = vadd.xlane.f32.xlu0 %v1304
  %v1306 = vpop.xlane.xlu0 %1305
  %v1307 = vsel %vm1261, %v1216, 0.0
  %1308 = vadd.xlane.f32.xlu0 %v1307
  %v1309 = vpop.xlane.xlu0 %1308
  %v1310 = vsel %vm1253, %v1218, 0.0
  %1311 = vadd.xlane.f32.xlu0 %v1310
  %v1312 = vpop.xlane.xlu0 %1311
  %v1313 = vsel %vm1257, %v1220, 0.0
  %1314 = vadd.xlane.f32.xlu0 %v1313
  %v1315 = vpop.xlane.xlu0 %1314
  %v1316 = vsel %vm1261, %v1222, 0.0
  %1317 = vadd.xlane.f32.xlu0 %v1316
  %v1318 = vpop.xlane.xlu0 %1317
  %v1319 = vsel %vm1253, %v1224, 0.0
  %1320 = vadd.xlane.f32.xlu0 %v1319
  %v1321 = vpop.xlane.xlu0 %1320
  %v1322 = vsel %vm1257, %v1226, 0.0
  %1323 = vadd.xlane.f32.xlu0 %v1322
  %v1324 = vpop.xlane.xlu0 %1323
  %v1325 = vsel %vm1261, %v1228, 0.0
  %1326 = vadd.xlane.f32.xlu0 %v1325
  %v1327 = vpop.xlane.xlu0 %1326
  %v1352 = vrot.slane %v1256, 2
  %v1353 = vrot.slane %v1260, 2
  %v1354 = vsel %vm745, %v1352, %v1353
  %v1355 = vrot.slane %v1264, 2
  %v1356 = vsel %vm745, %v1353, %v1355
  %v1357 = vrot.slane %v1267, 2
  %v1358 = vrot.slane %v1270, 2
  %v1359 = vsel %vm745, %v1357, %v1358
  %v1360 = vrot.slane %v1273, 2
  %v1361 = vsel %vm745, %v1358, %v1360
  %v1362 = vrot.slane %v1276, 2
  %v1363 = vrot.slane %v1279, 2
  %v1364 = vsel %vm745, %v1362, %v1363
  %v1365 = vrot.slane %v1282, 2
  %v1366 = vsel %vm745, %v1363, %v1365
  %v1367 = vrot.slane %v1285, 2
  %v1368 = vrot.slane %v1288, 2
  %v1369 = vsel %vm745, %v1367, %v1368
  %v1370 = vrot.slane %v1291, 2
  %v1371 = vsel %vm745, %v1368, %v1370
  %v1372 = vrot.slane %v1294, 2
  %v1373 = vrot.slane %v1297, 2
  %v1374 = vsel %vm745, %v1372, %v1373
  %v1375 = vrot.slane %v1300, 2
  %v1376 = vsel %vm745, %v1373, %v1375
  %v1377 = vrot.slane %v1303, 2
  %v1378 = vrot.slane %v1306, 2
  %v1379 = vsel %vm745, %v1377, %v1378
  %v1380 = vrot.slane %v1309, 2
  %v1381 = vsel %vm745, %v1378, %v1380
  %v1382 = vrot.slane %v1312, 2
  %v1383 = vrot.slane %v1315, 2
  %v1384 = vsel %vm745, %v1382, %v1383
  %v1385 = vrot.slane %v1318, 2
  %v1386 = vsel %vm745, %v1383, %v1385
  %v1387 = vrot.slane %v1321, 2
  %v1388 = vrot.slane %v1324, 2
  %v1389 = vsel %vm745, %v1387, %v1388
  %v1390 = vrot.slane %v1327, 2
  %v1391 = vsel %vm745, %v1388, %v1390
  %v1408 = vadd.f32 %v1354, %v1356
  %v1409 = vrot.slane %v1408, 4
  %v1410 = vadd.f32 %v1408, %v1409
  %v1411 = vrot.slane %v1410, 2
  %v1412 = vadd.f32 %v1410, %v1411
  %v1413 = vrot.slane %v1412, 1
  %v1414 = vadd.f32 %v1412, %v1413
  %v1415 = vadd.f32 %v1359, %v1361
  %v1416 = vrot.slane %v1415, 4
  %v1417 = vadd.f32 %v1415, %v1416
  %v1418 = vrot.slane %v1417, 2
  %v1419 = vadd.f32 %v1417, %v1418
  %v1420 = vrot.slane %v1419, 1
  %v1421 = vadd.f32 %v1419, %v1420
  %v1422 = vadd.f32 %v1364, %v1366
  %v1423 = vrot.slane %v1422, 4
  %v1424 = vadd.f32 %v1422, %v1423
  %v1425 = vrot.slane %v1424, 2
  %v1426 = vadd.f32 %v1424, %v1425
  %v1427 = vrot.slane %v1426, 1
  %v1428 = vadd.f32 %v1426, %v1427
  %v1429 = vadd.f32 %v1369, %v1371
  %v1430 = vrot.slane %v1429, 4
  %v1431 = vadd.f32 %v1429, %v1430
  %v1432 = vrot.slane %v1431, 2
  %v1433 = vadd.f32 %v1431, %v1432
  %v1434 = vrot.slane %v1433, 1
  %v1435 = vadd.f32 %v1433, %v1434
  %v1436 = vadd.f32 %v1374, %v1376
  %v1437 = vrot.slane %v1436, 4
  %v1438 = vadd.f32 %v1436, %v1437
  %v1439 = vrot.slane %v1438, 2
  %v1440 = vadd.f32 %v1438, %v1439
  %v1441 = vrot.slane %v1440, 1
  %v1442 = vadd.f32 %v1440, %v1441
  %v1443 = vadd.f32 %v1379, %v1381
  %v1444 = vrot.slane %v1443, 4
  %v1445 = vadd.f32 %v1443, %v1444
  %v1446 = vrot.slane %v1445, 2
  %v1447 = vadd.f32 %v1445, %v1446
  %v1448 = vrot.slane %v1447, 1
  %v1449 = vadd.f32 %v1447, %v1448
  %v1450 = vadd.f32 %v1384, %v1386
  %v1451 = vrot.slane %v1450, 4
  %v1452 = vadd.f32 %v1450, %v1451
  %v1453 = vrot.slane %v1452, 2
  %v1454 = vadd.f32 %v1452, %v1453
  %v1455 = vrot.slane %v1454, 1
  %v1456 = vadd.f32 %v1454, %v1455
  %v1457 = vadd.f32 %v1389, %v1391
  %v1458 = vrot.slane %v1457, 4
  %v1459 = vadd.f32 %v1457, %v1458
  %v1460 = vrot.slane %v1459, 2
  %v1461 = vadd.f32 %v1459, %v1460
  %v1462 = vrot.slane %v1461, 1
  %v1463 = vadd.f32 %v1461, %v1462
  %v1464 = vadd.f32 %v1414, %v1421
  %v1465 = vadd.f32 %v1464, %v1428
  %v1466 = vadd.f32 %v1465, %v1435
  %v1467 = vadd.f32 %v1466, %v1442
  %v1468 = vadd.f32 %v1467, %v1449
  %v1469 = vadd.f32 %v1468, %v1456
  %v1470 = vadd.f32 %v1469, %v1463
  %1471 = vst [vmem:[%s1] sm:$0xff] %v1470
  // Predicated region
  $region6: #{hf_loss.1} parent=0 // pred_check
    _
  $region7: #{hf_loss.1} parent=0 // pred_check_branch
    %1473 = sbr.rel (0) target = $region9
  $region8: #{hf_loss.1} parent=0 // pred_region
    _
  $region9: #{hf_loss.1} parent=0 // pred_fallthru
    _
  // Predicated region
  $region10: #{hf_loss.1} parent=0 // pred_check
    _
  $region11: #{hf_loss.1} parent=0 // pred_check_branch
    %1475 = sbr.rel (0) target = $region13
  $region12: #{hf_loss.1} parent=0 // pred_region
    _
  $region13: #{hf_loss.1} parent=0 // pred_fallthru
    _

</llo_original>
